<compile_context>
chip_gen: v7x
topology: tpu7x:2x2x1
jax: 0.10.0
libtpu: 0.0.40
codegen_flags: <defaults>
</compile_context>

<pallas_src>
import numpy as np
import jax
import jax.numpy as jnp
from jax.experimental import pallas as pl
from jax.experimental.pallas import tpu as pltpu


_LANE = 128
_MAX_HOISTED_ONEHOT_BYTES = 8 * 1024 * 1024


def _round_up(x: int, m: int) -> int:
    return ((x + m - 1) // m) * m


def _sublane_multiple(dtype) -> int:
    itemsize = jnp.dtype(dtype).itemsize
    return max(8, 32 // max(itemsize, 1))


# -----------------------------------------------------------------------------
# Generation-aware budgets & rooflines
# -----------------------------------------------------------------------------
_CHIP_PARAMS = None


def _chip_params():
    """Rough per-generation rooflines + VMEM budgets (host-side, cached)."""
    global _CHIP_PARAMS
    if _CHIP_PARAMS is not None:
        return _CHIP_PARAMS
    kind = ""
    try:
        kind = jax.devices()[0].device_kind.lower()
    except Exception:
        pass
    # Conservative defaults (v7x-like: 64 MiB physical VMEM).
    p = dict(mxu_flops=400e12, mxu_n=256, hbm_bw=1.2e12, vst_bw=5e11,
             vmem_limit=48 << 20, work_budget=40 << 20)
    if ("v5 lite" in kind) or ("v5e" in kind) or ("v5lite" in kind):
        p.update(mxu_flops=197e12, mxu_n=128, hbm_bw=0.82e12, vst_bw=5e11,
                 vmem_limit=100 << 20, work_budget=80 << 20)
    elif "v5p" in kind or "v5" in kind:
        p.update(mxu_flops=459e12, mxu_n=128, hbm_bw=1.2e12, vst_bw=5e11,
                 vmem_limit=100 << 20, work_budget=80 << 20)
    elif "v6" in kind:
        p.update(mxu_flops=918e12, mxu_n=256, hbm_bw=1.4e12, vst_bw=1e12,
                 vmem_limit=100 << 20, work_budget=80 << 20)
    elif "v7" in kind:
        p.update(mxu_flops=996e12, mxu_n=256, hbm_bw=3.2e12, vst_bw=1e12,
                 vmem_limit=48 << 20, work_budget=40 << 20)
    # Refine against the real physical VMEM where the query is available.
    try:
        info = pltpu.get_tpu_info()
        vmem_phys = int(getattr(info, "vmem_capacity_bytes"))
        p["vmem_limit"] = min(p["vmem_limit"], max(16 << 20, (vmem_phys * 3) // 4))
        p["work_budget"] = min(p["work_budget"], max(12 << 20, (vmem_phys * 3) // 5))
    except Exception:
        pass
    _CHIP_PARAMS = p
    return p


# -----------------------------------------------------------------------------
# Host-side helpers
# -----------------------------------------------------------------------------
def _contiguous_runs(idx: np.ndarray):
    """Maximal (src_start, dst_start, length) runs of consecutive source columns."""
    runs = []
    src0 = int(idx[0])
    dst0 = 0
    length = 1
    for t in range(1, len(idx)):
        if int(idx[t]) == src0 + length:
            length += 1
        else:
            runs.append((src0, dst0, length))
            src0 = int(idx[t])
            dst0 = t
            length = 1
    runs.append((src0, dst0, length))
    return runs


def _pick_row_tile(n: int, per_row_bytes: int, budget_bytes: int, dtype) -> int:
    mult = _sublane_multiple(dtype)
    if n <= mult:
        return n  # whole (full-extent) row axis as a single block
    for tn in (1024, 512, 256, 128, 64, 32, 16, 8):
        if tn % mult != 0:
            continue
        if tn <= n and tn * per_row_bytes <= budget_bytes:
            return tn
    # Nothing fits the budget: clamp to the smallest legal tile (never the
    # whole row axis, which could blow past physical VMEM for huge G).
    return mult


def _effective_gene_tile(g: int, gene_tile) -> int:
    tg = 512 if gene_tile is None else int(gene_tile)
    tg = max(_LANE, _round_up(tg, _LANE))
    if tg >= g:
        return g  # single full-extent gene block (always a legal block shape)
    return tg


_ONEHOT_CACHE = {}


def _get_onehot(g: int, k_pad: int, idx_np: np.ndarray, dtype):
    """Precomputed (G, K_pad) one-hot gather matrix (built once per filter)."""
    key = (g, k_pad, jnp.dtype(dtype).name, idx_np.tobytes())
    oh = _ONEHOT_CACHE.get(key)
    if oh is None:
        idx_pad = np.full((k_pad,), -1, dtype=np.int64)
        idx_pad[: len(idx_np)] = idx_np
        mask = np.arange(g, dtype=np.int64)[:, None] == idx_pad[None, :]
        oh = jnp.asarray(mask).astype(dtype)       # padded columns are all-zero
        _ONEHOT_CACHE[key] = oh
    return oh


# -----------------------------------------------------------------------------
# Path 1: contiguous-run sliced copies (bandwidth-bound, exact for all dtypes)
# -----------------------------------------------------------------------------
def _copy_kernel_factory(runs):
    def kernel(x_ref, y_ref):
        # Runs are host-static -> statically unrolled sliced copies.  The output
        # block is exactly (tn, K): no padding, no zero fill.
        for src, dst, length in runs:
            y_ref[:, dst:dst + length] = x_ref[:, src:src + length]
    return kernel


def _gather_copy(x, runs, k, chip):
    n, g = x.shape
    ds = jnp.dtype(x.dtype).itemsize
    per_row = 2 * (g + k) * ds                      # double-buffered in + out
    tn = _pick_row_tile(n, per_row, chip["work_budget"], x.dtype)
    grid = (pl.cdiv(n, tn),)
    cost = pl.CostEstimate(flops=0, transcendentals=0,
                           bytes_accessed=int(n * (g + k) * ds))
    return pl.pallas_call(
        _copy_kernel_factory(runs),
        out_shape=jax.ShapeDtypeStruct((n, k), x.dtype),
        grid_spec=pltpu.PrefetchScalarGridSpec(
            num_scalar_prefetch=0,
            grid=grid,
            in_specs=[pl.BlockSpec((tn, g), lambda i: (i, 0))],
            out_specs=pl.BlockSpec((tn, k), lambda i: (i, 0)),
        ),
        compiler_params=pltpu.CompilerParams(
            dimension_semantics=("parallel",),
            vmem_limit_bytes=chip["vmem_limit"],
        ),
        cost_estimate=cost,
    )(x)


# -----------------------------------------------------------------------------
# Path 2: one-hot matmul, one-hot precomputed in the wrapper (resident input)
# -----------------------------------------------------------------------------
def _hoisted_kernel_factory(k, cast_to_f32):
    def kernel(x_ref, oh_ref, y_ref):
        xv = x_ref[...]
        if cast_to_f32:
            # Per-tile cast: integer data is read once from HBM and converted
            # in VMEM, never materialized as a whole f32 array in HBM.
            xv = xv.astype(jnp.float32)
        acc = jnp.dot(xv, oh_ref[...], preferred_element_type=jnp.float32)
        y_ref[...] = acc[:, :k].astype(y_ref.dtype)
    return kernel


def _gather_matmul_hoisted(x, idx_np, k, k_pad, chip):
    n, g = x.shape
    ds = jnp.dtype(x.dtype).itemsize
    is_int = jnp.issubdtype(x.dtype, jnp.integer)
    oh_dtype = jnp.float32 if is_int else x.dtype
    onehot = _get_onehot(g, k_pad, idx_np, oh_dtype)
    oh_bytes = g * k_pad * jnp.dtype(oh_dtype).itemsize

    per_row = 2 * (g + k) * ds
    # Account the one-hot conservatively at 2x even though its block index is
    # constant (single fetch) -- keeps v7x's 64 MiB safe.
    budget = max(chip["work_budget"] - 2 * oh_bytes, 2 << 20)
    tn = _pick_row_tile(n, per_row, budget, x.dtype)
    grid = (pl.cdiv(n, tn),)
    cost = pl.CostEstimate(flops=int(2 * n * g * k_pad), transcendentals=0,
                           bytes_accessed=int(n * (g + k) * ds + oh_bytes))
    return pl.pallas_call(
        _hoisted_kernel_factory(k, is_int),
        out_shape=jax.ShapeDtypeStruct((n, k), x.dtype),
        grid_spec=pltpu.PrefetchScalarGridSpec(
            num_scalar_prefetch=0,
            grid=grid,
            in_specs=[
                pl.BlockSpec((tn, g), lambda i: (i, 0)),        # x row tile
                pl.BlockSpec((g, k_pad), lambda i: (0, 0)),     # one-hot, resident
            ],
            out_specs=pl.BlockSpec((tn, k), lambda i: (i, 0)),
        ),
        # One-hot is a plain input now -> the row grid can use both TensorCores.
        compiler_params=pltpu.CompilerParams(
            dimension_semantics=("parallel",),
            vmem_limit_bytes=chip["vmem_limit"],
        ),
        cost_estimate=cost,
    )(x, onehot)


# -----------------------------------------------------------------------------
# Path 3: gene-tiled one-hot matmul, SKIPPING gene tiles with no kept columns
# -----------------------------------------------------------------------------
def _tiled_kernel_factory(g, tg, k, cast_to_f32):
    def kernel(act_ref, idx_ref, x_ref, y_ref, acc_ref):
        j = pl.program_id(1)
        kp = idx_ref.shape[1]

        @pl.when(j == 0)
        def _():
            acc_ref[...] = jnp.zeros_like(acc_ref)

        xv = x_ref[...]
        if cast_to_f32:
            xv = xv.astype(jnp.float32)

        base = act_ref[j] * tg                     # element offset of this tile
        if g % tg != 0:
            # A partial gene tile may read out-of-bounds garbage: zero it so
            # garbage * 0 one-hot cannot inject NaN/Inf into the accumulator.
            lane = jax.lax.broadcasted_iota(jnp.int32, xv.shape, 1) + base
            xv = jnp.where(lane < g, xv, jnp.zeros_like(xv))

        # Per-tile one-hot is rebuilt on the VPU: free filler while the kernel
        # is HBM-bound (the common regime at K_pad ~ 128).
        col_ids = jax.lax.broadcasted_iota(jnp.int32, (tg, kp), 0) + base
        onehot = (col_ids == idx_ref[...]).astype(xv.dtype)
        acc_ref[...] += jnp.dot(xv, onehot, preferred_element_type=jnp.float32)

        @pl.when(j == pl.num_programs(1) - 1)
        def _():
            y_ref[...] = acc_ref[:, :k].astype(y_ref.dtype)

    return kernel


def _gather_matmul_tiled(x, idx_np, k, k_pad, chip, gene_tile=None):
    n, g = x.shape
    ds = jnp.dtype(x.dtype).itemsize
    is_int = jnp.issubdtype(x.dtype, jnp.integer)
    tg = _effective_gene_tile(g, gene_tile)

    # Host-static set of gene tiles that actually contain kept columns.
    active_np = np.unique(idx_np // tg).astype(np.int32)
    n_active = int(active_np.shape[0])
    active = jnp.asarray(active_np)

    idx_pad = np.full((1, k_pad), -1, dtype=np.int32)
    idx_pad[0, :k] = np.asarray(idx_np, dtype=np.int32)
    idx = jnp.asarray(idx_pad)

    per_row = 2 * (tg + k) * ds + k_pad * 4        # x + y double-buffered + f32 acc
    fixed = tg * k_pad * 4                         # per-step one-hot temporary
    tn = _pick_row_tile(n, per_row, max(chip["work_budget"] - fixed, 2 << 20), x.dtype)
    grid = (pl.cdiv(n, tn), n_active)
    cost = pl.CostEstimate(
        flops=int(2 * n * n_active * tg * k_pad), transcendentals=0,
        bytes_accessed=int(n * (n_active * tg + k) * ds + k_pad * 4))
    return pl.pallas_call(
        _tiled_kernel_factory(g, tg, k, is_int),
        out_shape=jax.ShapeDtypeStruct((n, k), x.dtype),
        grid_spec=pltpu.PrefetchScalarGridSpec(
            num_scalar_prefetch=1,                 # `active` -> SMEM, drives index_map
            grid=grid,
            in_specs=[
                pl.BlockSpec((1, k_pad), lambda i, j, act: (0, 0)),
                pl.BlockSpec((tn, tg), lambda i, j, act: (i, act[j])),
            ],
            out_specs=pl.BlockSpec((tn, k), lambda i, j, act: (i, 0)),
            scratch_shapes=[pltpu.VMEM((tn, k_pad), jnp.float32)],
        ),
        compiler_params=pltpu.CompilerParams(
            dimension_semantics=("parallel", "arbitrary"),
            vmem_limit_bytes=chip["vmem_limit"],
        ),
        cost_estimate=cost,
    )(active, idx, x)


# -----------------------------------------------------------------------------
# Path selection (host-side roofline, generation aware)
# -----------------------------------------------------------------------------
def _choose_path(n, g, k, k_pad, runs, idx_np, ds, chip, gene_tile):
    hbm = chip["hbm_bw"]
    vst = chip["vst_bw"]
    # Derate the MXU when K_pad under-fills its N dimension (128 on v5e,
    # 256 on v6e/v7x).
    mxu = chip["mxu_flops"] * min(1.0, k_pad / float(chip["mxu_n"]))

    lane_groups = sum(-(-ln // _LANE) for _, _, ln in runs)
    copy_ns = (n * (g + k) * ds) / hbm + (n * lane_groups * _LANE * ds) / vst
    # Copy path needs a full (tn, G) row slab in VMEM; disqualify it when even
    # the smallest legal tile cannot fit.
    if 8 * 2 * (g + k) * ds > chip["work_budget"]:
        copy_ns = float("inf")

    tg = _effective_gene_tile(g, gene_tile)
    n_active = int(np.unique(idx_np // tg).shape[0])
    g_read = n_active * tg
    oh_bytes = g * k_pad * ds
    hoist_ok = oh_bytes <= min(_MAX_HOISTED_ONEHOT_BYTES, chip["work_budget"] // 3)

    hoist_ns = float("inf")
    if hoist_ok:
        hoist_ns = max((n * (g + k) * ds + oh_bytes) / hbm,
                       2.0 * n * g * k_pad / mxu)
    tiled_ns = max((n * (g_read + k) * ds) / hbm,
                   2.0 * n * g_read * k_pad / mxu)

    best = min(copy_ns, hoist_ns, tiled_ns)
    if best == copy_ns:
        return "copy"
    if best == hoist_ns:
        return "matmul"
    return "matmul_tiled"


# -----------------------------------------------------------------------------
# Public gather + module
# -----------------------------------------------------------------------------
def pallas_column_gather(x_ng: jax.Array, filter_indices, *, force_path=None,
                         gene_tile=None) -> jax.Array:
    """y_ng = x_ng[:, filter_indices] using a Pallas TPU kernel."""
    n, g = x_ng.shape
    idx_np = np.asarray(filter_indices, dtype=np.int64).reshape(-1)
    k = int(idx_np.shape[0])
    k_pad = _round_up(k, _LANE)
    runs = _contiguous_runs(idx_np)
    ds = jnp.dtype(x_ng.dtype).itemsize
    is_int = jnp.issubdtype(x_ng.dtype, jnp.integer)
    chip = _chip_params()

    if force_path is not None:
        path = force_path
    elif is_int:
        # Bit-exact for any integer dtype / magnitude; no whole-array cast.
        path = "copy"
    else:
        path = _choose_path(n, g, k, k_pad, runs, idx_np, ds, chip, gene_tile)

    if path == "copy":
        return _gather_copy(x_ng, runs, k, chip)
    if path == "matmul":
        # TODO(synk): forced MXU path for integers is exact only for |values| < 2^24.
        return _gather_matmul_hoisted(x_ng, idx_np, k, k_pad, chip)
    if path == "matmul_tiled":
        return _gather_matmul_tiled(x_ng, idx_np, k, k_pad, chip, gene_tile)
    raise ValueError(f"unknown path {path!r}")


class FilterPallas:
    """JAX/Pallas port of the cellarium Filter transform."""

    def __init__(self, filter_list):
        self.filter_list = np.array(filter_list)
        if len(self.filter_list) == 0:
            raise ValueError(f"`filter_list` must not be empty. Got {self.filter_list}")
        self._cache = {}

    def filter(self, var_names_g: tuple) -> np.ndarray:
        # String membership test has no Pallas equivalent -> stays on host.
        if var_names_g in self._cache:
            return self._cache[var_names_g]
        mask = np.isin(var_names_g, self.filter_list)
        if not np.any(mask):
            raise AssertionError("No features in `var_names_g` matched the `filter_list`")
        mask_indices = np.where(mask)[0]
        self._cache[var_names_g] = mask_indices
        return mask_indices

    def __call__(self, x_ng: jax.Array, var_names_g: np.ndarray) -> dict:
        assert x_ng.shape[1] == len(var_names_g), (
            f"x_ng has {x_ng.shape[1]} columns but var_names_g has {len(var_names_g)} entries"
        )
        filter_indices = self.filter(tuple(var_names_g.tolist()))
        x_filtered = pallas_column_gather(x_ng, filter_indices)
        var_filtered = var_names_g[filter_indices]
        return {"x_ng": x_filtered, "var_names_g": var_filtered}


if __name__ == "__main__":
    key = jax.random.PRNGKey(0)

    # ---- Test 1: module end-to-end with the default (roofline) path ----
    n, g = 8, 32
    k1, key = jax.random.split(key)
    x_ng = jax.random.poisson(k1, lam=3.0, shape=(n, g)).astype(jnp.float32)
    var_names_g = np.array([f"gene_{i}" for i in range(g)])
    filter_list = [f"gene_{i}" for i in range(0, g, 3)]      # 11 features kept

    module = FilterPallas(filter_list)
    out = module(x_ng, var_names_g)
    y = jax.block_until_ready(out["x_ng"])
    filter_indices = module.filter(tuple(var_names_g.tolist()))
    y_ref = np.asarray(x_ng)[:, filter_indices]
    np.testing.assert_allclose(np.asarray(y), y_ref, rtol=0, atol=0)
    assert y.shape == (n, len(filter_indices))
    assert list(out["var_names_g"]) == [var_names_g[i] for i in filter_indices]

    # ---- Test 2: forced copy path (unpadded (N, K) output, no zero fill) ----
    y2 = jax.block_until_ready(
        pallas_column_gather(x_ng, filter_indices, force_path="copy"))
    np.testing.assert_allclose(np.asarray(y2), y_ref, rtol=0, atol=0)

    # ---- Test 3: forced hoisted-matmul path (precomputed one-hot input) ----
    y3 = jax.block_until_ready(
        pallas_column_gather(x_ng, filter_indices, force_path="matmul"))
    np.testing.assert_allclose(np.asarray(y3), y_ref, rtol=0, atol=0)

    # ---- Test 4: gene-tiled path with active-tile skipping + partial tile ----
    n4, g4 = 16, 600
    k2, key = jax.random.split(key)
    x4 = jax.random.normal(k2, (n4, g4), dtype=jnp.float32)
    idx4 = np.concatenate([np.arange(130, 180), np.arange(560, 600)])  # tiles 1 & 4 of 5
    y4 = jax.block_until_ready(
        pallas_column_gather(x4, idx4, force_path="matmul_tiled", gene_tile=128))
    np.testing.assert_allclose(np.asarray(y4), np.asarray(x4)[:, idx4], rtol=0, atol=0)

    # ---- Test 5: integer counts default to the copy path (bit-exact) ----
    k3, key = jax.random.split(key)
    x5 = jax.random.poisson(k3, lam=5.0, shape=(n, g)).astype(jnp.int32)
    y5 = jax.block_until_ready(pallas_column_gather(x5, filter_indices))
    np.testing.assert_array_equal(np.asarray(y5), np.asarray(x5)[:, filter_indices])

    # ---- Test 6: integer forced through the MXU path (per-tile in-kernel cast) ----
    y6 = jax.block_until_ready(
        pallas_column_gather(x5, filter_indices, force_path="matmul"))
    np.testing.assert_array_equal(np.asarray(y6), np.asarray(x5)[:, filter_indices])

    print("KERNEL_OK")
</pallas_src>

<mosaic_0001>
module attributes {stable_mosaic.version = 11 : i64} {
  func.func @kernel(%arg0: i32, %arg1: i32, %arg2: memref<1xi32, #tpu.memory_space<smem>>, %arg3: memref<1x128xi32, #tpu.memory_space<vmem>>, %arg4: memref<8x32xf32, #tpu.memory_space<vmem>>, %arg5: memref<8x11xf32, #tpu.memory_space<vmem>>, %arg6: memref<8x128xf32, #tpu.memory_space<vmem>>) attributes {dimension_semantics = [#tpu.dimension_semantics<parallel>, #tpu.dimension_semantics<arbitrary>], iteration_bounds = array<i64: 1, 1>, scalar_prefetch = 1 : i64, scratch_operands = 1 : i64, tpu.core_type = #tpu.core_type<tc>, window_params = [{pipeline_mode = #tpu.pipeline_mode<synchronous>, transform_indices = @transform_0, window_bounds = array<i64: 1, 128>}, {transform_indices = @transform_1, window_bounds = array<i64: 8, 32>}, {transform_indices = @transform_2, window_bounds = array<i64: 8, 11>}]} {
    %c0_i32 = arith.constant 0 : i32
    %0 = arith.cmpi eq, %arg1, %c0_i32 : i32
    %1 = arith.extui %0 : i1 to i32
    %c0_i32_0 = arith.constant 0 : i32
    %2 = arith.cmpi ne, %1, %c0_i32_0 : i32
    scf.if %2 {
      %cst_10 = arith.constant 0.000000e+00 : f32
      %22 = vector.broadcast %cst_10 : f32 to vector<8x128xf32>
      %c0_11 = arith.constant 0 : index
      %c0_12 = arith.constant 0 : index
      %23 = vector.load %arg6[%c0_11, %c0_12] : memref<8x128xf32, #tpu.memory_space<vmem>>, vector<8x128xf32>
      tpu.vector_store %arg6[%c0_11, %c0_12], %22 {strides = array<i32>} : memref<8x128xf32, #tpu.memory_space<vmem>>, vector<8x128xf32>,
    } else {
    }
    %c0 = arith.constant 0 : index
    %c0_1 = arith.constant 0 : index
    %3 = vector.load %arg4[%c0, %c0_1] : memref<8x32xf32, #tpu.memory_space<vmem>>, vector<8x32xf32>
    %4 = arith.index_cast %arg1 : i32 to index
    %5 = memref.load %arg2[%4] : memref<1xi32, #tpu.memory_space<smem>>
    %c32_i32 = arith.constant 32 : i32
    %6 = arith.muli %5, %c32_i32 : i32
    %7 = tpu.iota {dimensions = array<i32: 0>} : vector<32x128xi32>
    %8 = vector.broadcast %6 : i32 to vector<32x128xi32>
    %9 = arith.addi %7, %8 : vector<32x128xi32>
    %c0_2 = arith.constant 0 : index
    %c0_3 = arith.constant 0 : index
    %10 = vector.load %arg3[%c0_2, %c0_3] : memref<1x128xi32, #tpu.memory_space<vmem>>, vector<1x128xi32>
    %11 = vector.broadcast %10 : vector<1x128xi32> to vector<32x128xi32>
    %12 = arith.cmpi eq, %9, %11 : vector<32x128xi32>
    %13 = arith.extui %12 : vector<32x128xi1> to vector<32x128xi32>
    %14 = arith.sitofp %13 : vector<32x128xi32> to vector<32x128xf32>
    %c0_4 = arith.constant 0 : index
    %c0_5 = arith.constant 0 : index
    %15 = vector.load %arg6[%c0_4, %c0_5] : memref<8x128xf32, #tpu.memory_space<vmem>>, vector<8x128xf32>
    %cst = arith.constant dense<0.000000e+00> : vector<8x128xf32>
    %16 = tpu.matmul %3, %14, %cst {dimension_numbers = #tpu.dot_dimension_numbers<[1], [0], [0], [1], [0, 0, 1, 1], [], []>} : vector<8x32xf32>, vector<32x128xf32>, vector<8x128xf32> -> vector<8x128xf32>
    %17 = arith.addf %15, %16 : vector<8x128xf32>
    %c0_6 = arith.constant 0 : index
    %c0_7 = arith.constant 0 : index
    %18 = vector.load %arg6[%c0_6, %c0_7] : memref<8x128xf32, #tpu.memory_space<vmem>>, vector<8x128xf32>
    tpu.vector_store %arg6[%c0_6, %c0_7], %17 {strides = array<i32>} : memref<8x128xf32, #tpu.memory_space<vmem>>, vector<8x128xf32>,
    %c0_i32_8 = arith.constant 0 : i32
    %19 = arith.cmpi eq, %arg1, %c0_i32_8 : i32
    %20 = arith.extui %19 : i1 to i32
    %c0_i32_9 = arith.constant 0 : i32
    %21 = arith.cmpi ne, %20, %c0_i32_9 : i32
    scf.if %21 {
      %c0_10 = arith.constant 0 : index
      %c0_11 = arith.constant 0 : index
      %22 = vector.load %arg6[%c0_10, %c0_11] : memref<8x128xf32, #tpu.memory_space<vmem>>, vector<8x11xf32>
      %c0_12 = arith.constant 0 : index
      %c0_13 = arith.constant 0 : index
      %23 = vector.load %arg5[%c0_12, %c0_13] : memref<8x11xf32, #tpu.memory_space<vmem>>, vector<8x11xf32>
      tpu.vector_store %arg5[%c0_12, %c0_13], %22 {strides = array<i32>} : memref<8x11xf32, #tpu.memory_space<vmem>>, vector<8x11xf32>,
    } else {
    }
    return
  }
  func.func @transform_0(%arg0: i32, %arg1: i32, %arg2: memref<1xi32, #tpu.memory_space<smem>>) -> (i32, i32) {
    %c0_i32 = arith.constant 0 : i32
    %c0_i32_0 = arith.constant 0 : i32
    %c0_i32_1 = arith.constant 0 : i32
    return %c0_i32, %c0_i32_0 : i32, i32
  }
  func.func @transform_1(%arg0: i32, %arg1: i32, %arg2: memref<1xi32, #tpu.memory_space<smem>>) -> (i32, i32) {
    %0 = arith.index_cast %arg1 : i32 to index
    %1 = memref.load %arg2[%0] : memref<1xi32, #tpu.memory_space<smem>>
    %c0_i32 = arith.constant 0 : i32
    return %arg0, %1 : i32, i32
  }
  func.func @transform_2(%arg0: i32, %arg1: i32, %arg2: memref<1xi32, #tpu.memory_space<smem>>) -> (i32, i32) {
    %c0_i32 = arith.constant 0 : i32
    %c0_i32_0 = arith.constant 0 : i32
    return %arg0, %c0_i32 : i32, i32
  }
}

</mosaic_0001>

<llo_original>
// kernel: tpu_custom_call.1
$region0: #{tpu_custom_call.1}
  #allocation0 [shape = 'u32[]', space=smem, size = 0x4, offset = 0x4, fixed_abs, tag = 'smem constant byte address 0x4 - core index']
  #allocation1 [shape = 'u32[144,128]{1,0:T(1,128)}', space=vmem, size = 0x12000, scoped, tag = 'internal scratch']
  #allocation2 [shape = 'f32[8,128]{1,0:T(8,128)}', space=vmem, size = 0x1000, scoped, tag = 'scratch operand']
  #allocation3 [shape = 's32[1]{0}', space=sflag, size = 0x4, scoped, tag = 'scoped memory for tpu_custom_call.1']
  #allocation4 [shape = 's32[1]{0:T(128)S(6)}', space=smem, size = 0x200, scoped, tag = 'prefetched SMEM operand 0']
  %s0 = inlined_call_operand.<no memory space> [shape: s32[1], index: 0, kind: input, shape index: {}]
  %s1 = inlined_call_operand.vmem [shape: s32[1,128], index: 1, kind: input, shape index: {}]
  %s2 = inlined_call_operand.hbm [shape: f32[8,32], index: 2, kind: input, shape index: {}]
  %s3 = inlined_call_operand.hbm [shape: f32[8,11], index: 3, kind: output, shape index: {}]
  %s4 = sld [smem:[#allocation0]]
  $region30: #{tpu_custom_call.1} parent=0
    _
  %s6 = ssub.s32 1, %s4
  %s7 = scalar_select 0, %s6, %s4
  %8 = sst [smem:[#allocation4]] %s0
  $region1: #{tpu_custom_call.1} parent=0
    #allocation5 [shape = 'u8[4096]{0}', space=vmem, size = 0x1000, scoped, tag = 'input window, operand 2, single buffered']
    #allocation6 [shape = 's32[1]{0}', space=sflag, size = 0x4, scoped, tag = 'scoped memory for tpu_custom_call.1']
    #allocation7 [shape = 's32[1]{0}', space=sflag, size = 0x4, scoped, tag = 'scoped memory for tpu_custom_call.1']
    #allocation8 [shape = 'u8[4096]{0}', space=vmem, size = 0x1000, scoped, tag = 'output window, operand 0, single buffered']
    %9 = vsyncpa [#allocation6], 0
    %10 = vsyncpa [#allocation7], 0
    // Predicated region
    $region2: #{tpu_custom_call.1} parent=1 // pred_check
      _
    $region3: #{tpu_custom_call.1} parent=1 // pred_check_branch
      %12 = sbr.rel (0) target = $region5
    $region4: #{tpu_custom_call.1} parent=1 // pred_region
      _
    $region5: #{tpu_custom_call.1} parent=1 // pred_fallthru
      _
    // Predicated region
    $region6: #{tpu_custom_call.1} parent=1 // pred_check
      _
    $region7: #{tpu_custom_call.1} parent=1 // pred_check_branch
      %14 = sbr.rel (0) target = $region9
    $region8: #{tpu_custom_call.1} parent=1 // pred_region
      %s15 = sld [smem:[#allocation4]]
      %s17 = ssub.s32 128, 128
      %18 = vsyncadd [#allocation6], %s17
      %s19 = smul.addr %s15, 128
      %s20 = scalar_lea.hbm %s2, %s19
      %s22 = sshll.u32 [#allocation5], 4
      %s23 = int_to_ptr.vmem [resolvable:$true] %s22
      %25 = dma.hbm_to_vmem [thread:$0]  %s20, 128, %s23, [#allocation6]
    $region9: #{tpu_custom_call.1} parent=1 // pred_fallthru
      _
    // Predicated region
    $region10: #{tpu_custom_call.1} parent=1 // pred_check
      _
    $region11: #{tpu_custom_call.1} parent=1 // pred_check_branch
      %27 = sbr.rel (0) target = $region13
    $region12: #{tpu_custom_call.1} parent=1 // pred_region
      %28 = dma.done [#allocation6], 128
    $region13: #{tpu_custom_call.1} parent=1 // pred_fallthru
      _
    %s29 = sld [smem:[#allocation4]]
    %p30 = scmp.eq.s32.totalorder 0, 0
    // Predicated region
    $region14: #{tpu_custom_call.1} parent=1 // pred_check
      %p31 = pneg %p30
    $region15: #{tpu_custom_call.1} parent=1 // pred_check_branch
      %33 = sbr.rel (%p31) target = $region17
    $region16: #{tpu_custom_call.1} parent=1 // pred_region
      %34 = vst [vmem:[#allocation2] sm:$0xff] 0.0
    $region17: #{tpu_custom_call.1} parent=1 // pred_fallthru
      _
    %v35 = vld [vmem:[#allocation5] sm:$0xff]
    %s36 = sld [smem:[#allocation4]]
    %s37 = smul.u32 %s36, 32
    %v38 = vlaneseq
    %v39 = vshrl.u32 %v38, 7
    %v40 = vadd.s32 %v39, 8
    %v41 = vadd.s32 %v39, 16
    %v42 = vadd.s32 %v39, 24
    %v43 = vstv %s37
    %v44 = vadd.s32 %v39, %v43
    %v45 = vadd.s32 %v40, %v43
    %v46 = vadd.s32 %v41, %v43
    %v47 = vadd.s32 %v42, %v43
    %v48 = vld [vmem:[%s1] sm:$0x1]
    %v49 = vlaneseq
    %v50 = vshrl.u32 %v49, 7
    %v51 = vsub.s32 0, %v50
    %v52 = vrot.slane %v48, %v51
    %vm53 = vcmp.eq.s32.totalorder %v44, %v52
    %vm54 = vcmp.eq.s32.totalorder %v45, %v52
    %vm55 = vcmp.eq.s32.totalorder %v46, %v52
    %vm56 = vcmp.eq.s32.totalorder %v47, %v52
    %v57 = vsel %vm53, 1, 0
    %v58 = vsel %vm54, 1, 0
    %v59 = vsel %vm55, 1, 0
    %v60 = vsel %vm56, 1, 0
    %v61 = vcvt.s32.f32 %v57
    %v62 = vcvt.s32.f32 %v58
    %v63 = vcvt.s32.f32 %v59
    %v64 = vcvt.s32.f32 %v60
    %v65 = vld [vmem:[#allocation2] sm:$0xff]
    %vm66 = vcmask 261120
    %v68 = vsel %vm66, %v35, 0
    %70 = vmatprep.subr.mxu0 0.0
    %71 = vmatpush1.msra.mxu0 %v61
    %72 = vmatprep.subr.mxu0 0.0
    %73 = vmatpush1.msra.mxu0 %v62
    %74 = vmatprep.subr.mxu0 0.0
    %75 = vmatpush1.msra.mxu0 %v63
    %76 = vmatprep.subr.mxu0 0.0
    %77 = vmatpush1.msra.mxu0 %v64
    %78 = vmatprep.subr.mxu0 0.0
    %79 = vmatpush1.msra.mxu0 0.0
    %80 = vmatprep.subr.mxu0 0.0
    %81 = vmatpush1.msra.mxu0 0.0
    %82 = vmatprep.subr.mxu0 0.0
    %83 = vmatpush1.msra.mxu0 0.0
    %84 = vmatprep.subr.mxu0 0.0
    %85 = vmatpush1.msra.mxu0 0.0
    %86 = vmatprep.subr.mxu0 0.0
    %87 = vmatpush1.msra.mxu0 0.0
    %88 = vmatprep.subr.mxu0 0.0
    %89 = vmatpush1.msra.mxu0 0.0
    %90 = vmatprep.subr.mxu0 0.0
    %91 = vmatpush1.msra.mxu0 0.0
    %92 = vmatprep.subr.mxu0 0.0
    %93 = vmatpush1.msra.mxu0 0.0
    %94 = vmatprep.subr.mxu0 0.0
    %95 = vmatpush1.msra.mxu0 0.0
    %96 = vmatprep.subr.mxu0 0.0
    %97 = vmatpush1.msra.mxu0 0.0
    %98 = vmatprep.subr.mxu0 0.0
    %99 = vmatpush1.msra.mxu0 0.0
    %100 = vmatprep.subr.mxu0 0.0
    %101 = vmatpush1.msra.mxu0 0.0
    %102 = vmatprep.subr.mxu0 0.0
    %103 = vmatpush1.msra.mxu0 0.0
    %104 = vmatprep.subr.mxu0 0.0
    %105 = vmatpush1.msra.mxu0 0.0
    %106 = vmatprep.subr.mxu0 0.0
    %107 = vmatpush1.msra.mxu0 0.0
    %108 = vmatprep.subr.mxu0 0.0
    %109 = vmatpush1.msra.mxu0 0.0
    %110 = vmatprep.subr.mxu0 0.0
    %111 = vmatpush1.msra.mxu0 0.0
    %112 = vmatprep.subr.mxu0 0.0
    %113 = vmatpush1.msra.mxu0 0.0
    %114 = vmatprep.subr.mxu0 0.0
    %115 = vmatpush1.msra.mxu0 0.0
    %116 = vmatprep.subr.mxu0 0.0
    %117 = vmatpush1.msra.mxu0 0.0
    %118 = vmatprep.subr.mxu0 0.0
    %119 = vmatpush1.msra.mxu0 0.0
    %120 = vmatprep.subr.mxu0 0.0
    %121 = vmatpush1.msra.mxu0 0.0
    %122 = vmatprep.subr.mxu0 0.0
    %123 = vmatpush1.msra.mxu0 0.0
    %124 = vmatprep.subr.mxu0 0.0
    %125 = vmatpush1.msra.mxu0 0.0
    %126 = vmatprep.subr.mxu0 0.0
    %127 = vmatpush1.msra.mxu0 0.0
    %128 = vmatprep.subr.mxu0 0.0
    %129 = vmatpush1.msra.mxu0 0.0
    %130 = vmatprep.subr.mxu0 0.0
    %131 = vmatpush1.msra.mxu0 0.0
    %132 = vmatprep.subr.mxu0 0.0
    %133 = vmatpush1.msra.mxu0 0.0
    %134 = vmatprep.mubr.f32.mxu0 0.0
    %135 = vmatmul.mubr.f32.gmra.mrb[0].mxu0 %v68
    %v136 = vpop.f32.mrb[0].mxu0
    %v137 = vadd.f32 0.0, %v136
    %v138 = vpop.f32.mrb[0].mxu0
    %139 = vdwg.mxu0
    %v140 = vadd.f32 %v65, %v137
    %141 = vst [vmem:[#allocation2] sm:$0xff] %v140
    // Predicated region
    $region18: #{tpu_custom_call.1} parent=1 // pred_check
      %p142 = pneg %p30
    $region19: #{tpu_custom_call.1} parent=1 // pred_check_branch
      %144 = sbr.rel (%p142) target = $region21
    $region20: #{tpu_custom_call.1} parent=1 // pred_region
      %v145 = vld [vmem:[#allocation2] sm:$0xff]
      %vm146 = vcmask 89088
      %147 = vst.msk [vmem:[#allocation8] sm:$0xff] %vm146, %v145
    $region21: #{tpu_custom_call.1} parent=1 // pred_fallthru
      _
    // Predicated region
    $region22: #{tpu_custom_call.1} parent=1 // pred_check
      _
    $region23: #{tpu_custom_call.1} parent=1 // pred_check_branch
      %149 = sbr.rel (0) target = $region25
    $region24: #{tpu_custom_call.1} parent=1 // pred_region
      %s151 = ssub.s32 128, 128
      %152 = vsyncadd [#allocation7], %s151
      %s154 = sshll.u32 [#allocation8], 4
      %s155 = int_to_ptr.vmem [resolvable:$true] %s154
      %157 = dma.vmem_to_hbm [thread:$0]  %s155, 128, %s3, [#allocation7]
    $region25: #{tpu_custom_call.1} parent=1 // pred_fallthru
      _
    // Predicated region
    $region26: #{tpu_custom_call.1} parent=1 // pred_check
      _
    $region27: #{tpu_custom_call.1} parent=1 // pred_check_branch
      %159 = sbr.rel (0) target = $region29
    $region28: #{tpu_custom_call.1} parent=1 // pred_region
      %160 = dma.done [#allocation7], 128
    $region29: #{tpu_custom_call.1} parent=1 // pred_fallthru
      _
    %161 = vsyncpa [#allocation6], 1
    %162 = vsyncpa [#allocation7], 1

</llo_original>
